<compile_context>
chip_gen: v6e
topology: v6e:2x2x1
jax: 0.10.0
libtpu: 0.0.40
codegen_flags: <defaults>
</compile_context>

<pallas_src>
import functools

import numpy as np

import jax
import jax.numpy as jnp
from jax.experimental import pallas as pl
from jax.experimental.pallas import tpu as pltpu


# ----------------------------------------------------------------------------
# Glue (plain JAX + static numpy): spline basis / weight index (degree=1) and
# densification of the edge-wise scatter into a dense, degree-normalized A.
# ----------------------------------------------------------------------------
def spline_basis_deg1(pseudo, kernel_size, is_open_spline):
    """Port of torch_spline_conv basis for degree=1 (linear B-spline).

    pseudo: (E, D) float in [0, 1] (traced OK)
    kernel_size / is_open_spline: STATIC numpy arrays of length D
    returns basis (E, S) float32, weight_index (E, S) int32 with S = 2**D.
    """
    E, D = pseudo.shape
    S = 2 ** D
    kernel_size = np.asarray(kernel_size, np.int64)
    is_open_spline = np.asarray(is_open_spline, np.int64)

    d_range = np.arange(D)
    s_range = np.arange(S)
    k_mod = (s_range[:, None] // (2 ** d_range)[None, :]) % 2            # (S, D) static

    v = pseudo * jnp.asarray(kernel_size - is_open_spline, pseudo.dtype)  # (E, D)
    v_floor = jnp.floor(v)
    frac = v - v_floor                                                    # (E, D)

    wi_d = (v_floor.astype(jnp.int32)[:, None, :]
            + jnp.asarray(k_mod, jnp.int32)[None, :, :]) % jnp.asarray(
                kernel_size, jnp.int32)[None, None, :]
    offset = np.concatenate(
        [np.ones(1, np.int64), np.cumprod(kernel_size)[:-1]]).astype(np.int32)
    weight_index = jnp.sum(wi_d * jnp.asarray(offset)[None, None, :], axis=-1)   # (E, S)

    b_d = jnp.where(jnp.asarray(k_mod)[None, :, :] == 1,
                    frac[:, None, :], 1.0 - frac[:, None, :])
    basis = jnp.prod(b_d, axis=-1)                                        # (E, S)
    return basis.astype(jnp.float32), weight_index.astype(jnp.int32)


def dense_spline_adjacency(row, col, basis, weight_index, K, N_pad):
    """A[k, i, j] = sum_{e: row=i, col=j} sum_{s: widx[e,s]=k} basis[e,s]."""
    E, S = basis.shape
    A = jnp.zeros((K, N_pad, N_pad), jnp.float32)
    k_flat = weight_index.reshape(-1)
    r_flat = jnp.repeat(row, S)
    c_flat = jnp.repeat(col, S)
    return A.at[k_flat, r_flat, c_flat].add(basis.reshape(-1))


def pack_params(params, Din, Dh, K):
    """Pack the 5 spline convs used by the GRU into one weight stack of width 4H.

    Row order of the packed input:   [ hidden (Dh rows) | x (Din rows) ]
    Column order of the 4H outputs:  [ xr+hr | xz+hz | xn | hr ]
    (the r/z pre-activation sums happen inside the matmul -> 128 lanes at H=32)
    """
    H = Dh
    Wxr, Rxr, bxr = params["xr"]
    Whr, Rhr, bhr = params["hr"]
    Wxz, Rxz, bxz = params["xz"]
    Whz, Rhz, bhz = params["hz"]
    Wxn, Rxn, bxn = params["xn"]
    # "hn" exists in the module but is never used by forward().

    zW_h = jnp.zeros((K, Dh, H), jnp.float32)
    zW_x = jnp.zeros((K, Din, H), jnp.float32)
    W_hid = jnp.concatenate([Whr, Whz, zW_h, Whr], axis=2)            # (K, Dh, 4H)
    W_x = jnp.concatenate([Wxr, Wxz, Wxn, zW_x], axis=2)              # (K, Din, 4H)
    W_all = jnp.concatenate([W_hid, W_x], axis=1)                     # (K, Dh+Din, 4H)

    zR_h = jnp.zeros((Dh, H), jnp.float32)
    zR_x = jnp.zeros((Din, H), jnp.float32)
    R_hid = jnp.concatenate([Rhr, Rhz, zR_h, Rhr], axis=1)            # (Dh, 4H)
    R_x = jnp.concatenate([Rxr, Rxz, Rxn, zR_x], axis=1)              # (Din, 4H)
    R_all = jnp.concatenate([R_hid, R_x], axis=0)                     # (Dh+Din, 4H)

    b_all = jnp.concatenate([bxr + bhr, bxz + bhz, bxn, bhr]).reshape(1, 4 * H)
    return W_all, R_all, b_all


# ----------------------------------------------------------------------------
# Pallas kernel: one (row-tile, contraction-tile) step of A_flat @ V, with the
# GRU gate epilogue fused at the last contraction step.
# ----------------------------------------------------------------------------
def gcgru_kernel(a_ref, v_ref, root_ref, h_ref, out_ref, acc_ref):
    j = pl.program_id(1)

    @pl.when(j == 0)
    def _():
        acc_ref[...] = jnp.zeros_like(acc_ref)

    # (TM, TN) @ (TN, 4H) -> accumulate in f32 regardless of operand dtype.
    acc_ref[...] += jnp.dot(a_ref[...], v_ref[...],
                            preferred_element_type=jnp.float32)

    @pl.when(j == pl.num_programs(1) - 1)
    def _():
        H = out_ref.shape[1]
        s = acc_ref[...] + root_ref[...]              # (TM, 4H) f32
        rz = jax.nn.sigmoid(s[:, 0:2 * H])            # [r | z] slab
        r = rz[:, 0:H]
        z = rz[:, H:2 * H]
        # NOTE: faithful to the reference module, which reuses hr(hidden) (not hn)
        # inside the candidate-state computation.
        n = jnp.tanh(s[:, 2 * H:3 * H] + r * s[:, 3 * H:4 * H])
        out_ref[...] = ((1.0 - z) * n + z * h_ref[...]).astype(out_ref.dtype)


def _choose_col_tile(KN, max_tile):
    if KN <= max_tile:
        return KN
    t = max(128, max_tile - (max_tile % 128))
    while KN % t != 0:          # KN is a multiple of 128 whenever KN > max_tile
        t -= 128
    return t


def gcgru_forward(x, hidden, edge_index, edge_attr, params, kernel_size,
                  is_open_spline, compute_dtype=jnp.float32):
    # kernel_size / is_open_spline are STATIC python sequences -> K is a python int.
    kernel_size = np.asarray(kernel_size, np.int64)
    is_open_spline = np.asarray(is_open_spline, np.int64)
    K = int(np.prod(kernel_size))

    N, Din = x.shape
    Dh = hidden.shape[1]
    H = Dh
    C = Din + Dh
    F = 4 * H

    # Row-tile size: 128 rows per step when N is large; otherwise one full tile
    # rounded up to the sublane multiple of 8.
    if N > 128:
        TM = 128
        N_pad = ((N + TM - 1) // TM) * TM
    else:
        N_pad = max(8, ((N + 7) // 8) * 8)
        TM = N_pad

    row, col = edge_index[0], edge_index[1]
    basis, widx = spline_basis_deg1(edge_attr, kernel_size, is_open_spline)

    # Dense spline adjacency, pre-scaled by 1/clamp(deg,1)  (norm=True folded in).
    A = dense_spline_adjacency(row, col, basis, widx, K, N_pad)       # (K, N_pad, N_pad)
    deg = jnp.zeros((N_pad,), jnp.float32).at[row].add(1.0)
    inv_deg = 1.0 / jnp.maximum(deg, 1.0)
    A = A * inv_deg[None, :, None]

    # Packed node features [hidden | x].
    xh = jnp.concatenate([hidden, x], axis=1).astype(jnp.float32)     # (N, C)
    hidden_pad = hidden.astype(jnp.float32)
    if N_pad != N:
        xh = jnp.pad(xh, ((0, N_pad - N), (0, 0)))
        hidden_pad = jnp.pad(hidden_pad, ((0, N_pad - N), (0, 0)))

    W_all, R_all, b_all = pack_params(params, Din, Dh, K)

    # Grid-invariant projections, computed once in XLA (not per row tile).
    V = jnp.einsum("nc,kcf->knf", xh, W_all).reshape(K * N_pad, F)    # (K*N_pad, 4H)
    root_term = xh @ R_all + b_all                                    # (N_pad, 4H)

    # Flatten A's (k, j) onto one contraction axis, matching V's row layout.
    A_flat = jnp.transpose(A, (1, 0, 2)).reshape(N_pad, K * N_pad)    # (N_pad, K*N_pad)

    # Optional bf16 for the HBM-heavy streaming operands; gate math stays f32.
    A_flat = A_flat.astype(compute_dtype)
    V = V.astype(compute_dtype)

    KN = K * N_pad
    max_tile = 4096 if compute_dtype == jnp.bfloat16 else 2048
    TN = _choose_col_tile(KN, max_tile)
    grid = (N_pad // TM, KN // TN)

    out = pl.pallas_call(
        gcgru_kernel,
        out_shape=jax.ShapeDtypeStruct((N_pad, Dh), jnp.float32),
        grid=grid,
        in_specs=[
            pl.BlockSpec((TM, TN), lambda i, j: (i, j)),   # A_flat tile, streamed
            pl.BlockSpec((TN, F), lambda i, j: (j, 0)),    # V tile, streamed
            pl.BlockSpec((TM, F), lambda i, j: (i, 0)),    # root term, row-tiled
            pl.BlockSpec((TM, Dh), lambda i, j: (i, 0)),   # hidden, row-tiled
        ],
        out_specs=pl.BlockSpec((TM, Dh), lambda i, j: (i, 0)),
        scratch_shapes=[pltpu.VMEM((TM, F), jnp.float32)],
        compiler_params=pltpu.CompilerParams(
            dimension_semantics=("parallel", "arbitrary"),   # rows sharded, reduce last
            vmem_limit_bytes=32 * 1024 * 1024,
        ),
    )(A_flat, V, root_term, hidden_pad)
    return out[:N]


# ----------------------------------------------------------------------------
# Pure-JAX reference (edge-wise gather/scatter, mirrors the PyTorch module).
# ----------------------------------------------------------------------------
def spline_ref(v, W, root, bias, row, col, basis, widx, N):
    x_col = v[col]                               # (E, C)
    w_e = W[widx]                                # (E, S, C, O)
    msg = jnp.einsum("es,esco,ec->eo", basis, w_e, x_col)
    out = jnp.zeros((N, W.shape[2]), jnp.float32).at[row].add(msg)
    deg = jnp.zeros((N,), jnp.float32).at[row].add(1.0)
    out = out / jnp.maximum(deg, 1.0)[:, None]
    return out + v @ root + bias


def gcgru_ref(x, hidden, edge_index, edge_attr, params, kernel_size, is_open_spline):
    N = x.shape[0]
    row, col = edge_index[0], edge_index[1]
    basis, widx = spline_basis_deg1(edge_attr, kernel_size, is_open_spline)

    def sp(v, name):
        w, root, bias = params[name]
        return spline_ref(v, w, root, bias, row, col, basis, widx, N)

    r = jax.nn.sigmoid(sp(x, "xr") + sp(hidden, "hr"))
    z = jax.nn.sigmoid(sp(x, "xz") + sp(hidden, "hz"))
    n = jnp.tanh(sp(x, "xn") + r * sp(hidden, "hr"))
    return (1.0 - z) * n + z * hidden


# ----------------------------------------------------------------------------
if __name__ == "__main__":
    # Small shapes: N=16 graph nodes, input_dim=4, hidden_dim=32,
    # dim=2, kernel_size=2 per dim (K=4), E=48 edges.
    N, Din, Dh, D, KS, E = 16, 4, 32, 2, 2, 48
    K = KS ** D

    key = jax.random.PRNGKey(0)
    keys = iter(jax.random.split(key, 40))

    x = jax.random.normal(next(keys), (N, Din), jnp.float32)
    hidden = jax.random.normal(next(keys), (N, Dh), jnp.float32)
    row = jax.random.randint(next(keys), (E,), 0, N)
    col = jax.random.randint(next(keys), (E,), 0, N)
    edge_index = jnp.stack([row, col], axis=0)
    edge_attr = jax.random.uniform(next(keys), (E, D), jnp.float32)  # pseudo in [0,1)

    kernel_size = (KS,) * D        # STATIC python tuple -> K is a python int
    is_open_spline = (1,) * D      # STATIC

    # Deterministic parameter init (matches the module's shapes; Spline.reset_parameters
    # uses uniform(-1/sqrt(in*K), +1/sqrt(in*K))).
    def init_spline(k, c_in, c_out):
        bound = 1.0 / float(np.sqrt(c_in * K))
        k1, k2, k3 = jax.random.split(k, 3)
        w = jax.random.uniform(k1, (K, c_in, c_out), jnp.float32, -bound, bound)
        root = jax.random.uniform(k2, (c_in, c_out), jnp.float32, -bound, bound)
        bias = jax.random.uniform(k3, (c_out,), jnp.float32, -bound, bound)
        return (w, root, bias)

    params = {
        "xr": init_spline(next(keys), Din, Dh),
        "hr": init_spline(next(keys), Dh, Dh),
        "xz": init_spline(next(keys), Din, Dh),
        "hz": init_spline(next(keys), Dh, Dh),
        "xn": init_spline(next(keys), Din, Dh),
        "hn": init_spline(next(keys), Dh, Dh),  # present in the module, unused by forward
    }

    h_ref = gcgru_ref(x, hidden, edge_index, edge_attr, params, kernel_size, is_open_spline)

    # f32 path: exact match against the edge-wise reference.
    run_f32 = jax.jit(functools.partial(
        gcgru_forward, kernel_size=kernel_size, is_open_spline=is_open_spline,
        compute_dtype=jnp.float32))
    h_f32 = jax.block_until_ready(run_f32(x, hidden, edge_index, edge_attr, params))
    assert jnp.allclose(h_f32, h_ref, atol=1e-4, rtol=1e-4), "f32 mismatch vs reference"

    # bf16 streaming path (A / V in bf16, f32 accumulation + f32 gates): looser tolerance.
    run_bf16 = jax.jit(functools.partial(
        gcgru_forward, kernel_size=kernel_size, is_open_spline=is_open_spline,
        compute_dtype=jnp.bfloat16))
    h_bf16 = jax.block_until_ready(run_bf16(x, hidden, edge_index, edge_attr, params))
    assert jnp.allclose(h_bf16, h_ref, atol=5e-2, rtol=5e-2), "bf16 mismatch vs reference"

    print("KERNEL_OK")
</pallas_src>

<mosaic_0001>
module attributes {stable_mosaic.version = 11 : i64} {
  func.func private @main(%arg0: i32) attributes {dimension_semantics = [#tpu.dimension_semantics<core_parallel>], iteration_bounds = array<i64: 2>, tpu.core_type = #tpu.core_type<sc_scalar_subcore>, window_params = []} {
    return
  }
}

module attributes {stable_mosaic.version = 11 : i64} {
  func.func private @main(%arg0: i32) attributes {dimension_semantics = [#tpu.dimension_semantics<core_parallel>], iteration_bounds = array<i64: 2>, tpu.core_type = #tpu.core_type<sc_scalar_subcore>, window_params = []} {
    return
  }
}

module attributes {stable_mosaic.version = 11 : i64} {
  func.func @gcgru_kernel(%arg0: i32, %arg1: i32, %arg2: memref<16x64xf32, #tpu.memory_space<vmem>>, %arg3: memref<64x128xf32, #tpu.memory_space<vmem>>, %arg4: memref<16x128xf32, #tpu.memory_space<vmem>>, %arg5: memref<16x32xf32, #tpu.memory_space<vmem>>, %arg6: memref<16x32xf32, #tpu.memory_space<vmem>>, %arg7: memref<16x128xf32, #tpu.memory_space<vmem>>) attributes {dimension_semantics = [#tpu.dimension_semantics<parallel>, #tpu.dimension_semantics<arbitrary>], iteration_bounds = array<i64: 1, 1>, scalar_prefetch = 0 : i64, scratch_operands = 1 : i64, tpu.core_type = #tpu.core_type<tc>, window_params = [{transform_indices = @transform_0, window_bounds = array<i64: 16, 64>}, {transform_indices = @transform_1, window_bounds = array<i64: 64, 128>}, {transform_indices = @transform_2, window_bounds = array<i64: 16, 128>}, {transform_indices = @transform_3, window_bounds = array<i64: 16, 32>}, {transform_indices = @transform_4, window_bounds = array<i64: 16, 32>}]} {
    %c0_i32 = arith.constant 0 : i32
    %0 = arith.cmpi eq, %arg1, %c0_i32 : i32
    %1 = arith.extui %0 : i1 to i32
    %c0_i32_0 = arith.constant 0 : i32
    %2 = arith.cmpi ne, %1, %c0_i32_0 : i32
    scf.if %2 {
      %cst_10 = arith.constant 0.000000e+00 : f32
      %12 = vector.broadcast %cst_10 : f32 to vector<16x128xf32>
      %c0_11 = arith.constant 0 : index
      %c0_12 = arith.constant 0 : index
      %13 = vector.load %arg7[%c0_11, %c0_12] : memref<16x128xf32, #tpu.memory_space<vmem>>, vector<16x128xf32>
      tpu.vector_store %arg7[%c0_11, %c0_12], %12 {strides = array<i32>} : memref<16x128xf32, #tpu.memory_space<vmem>>, vector<16x128xf32>,
    } else {
    }
    %c0 = arith.constant 0 : index
    %c0_1 = arith.constant 0 : index
    %3 = vector.load %arg7[%c0, %c0_1] : memref<16x128xf32, #tpu.memory_space<vmem>>, vector<16x128xf32>
    %c0_2 = arith.constant 0 : index
    %c0_3 = arith.constant 0 : index
    %4 = vector.load %arg2[%c0_2, %c0_3] : memref<16x64xf32, #tpu.memory_space<vmem>>, vector<16x64xf32>
    %c0_4 = arith.constant 0 : index
    %c0_5 = arith.constant 0 : index
    %5 = vector.load %arg3[%c0_4, %c0_5] : memref<64x128xf32, #tpu.memory_space<vmem>>, vector<64x128xf32>
    %cst = arith.constant dense<0.000000e+00> : vector<16x128xf32>
    %6 = tpu.matmul %4, %5, %cst {dimension_numbers = #tpu.dot_dimension_numbers<[1], [0], [0], [1], [0, 0, 1, 1], [], []>} : vector<16x64xf32>, vector<64x128xf32>, vector<16x128xf32> -> vector<16x128xf32>
    %7 = arith.addf %3, %6 : vector<16x128xf32>
    %c0_6 = arith.constant 0 : index
    %c0_7 = arith.constant 0 : index
    %8 = vector.load %arg7[%c0_6, %c0_7] : memref<16x128xf32, #tpu.memory_space<vmem>>, vector<16x128xf32>
    tpu.vector_store %arg7[%c0_6, %c0_7], %7 {strides = array<i32>} : memref<16x128xf32, #tpu.memory_space<vmem>>, vector<16x128xf32>,
    %c0_i32_8 = arith.constant 0 : i32
    %9 = arith.cmpi eq, %arg1, %c0_i32_8 : i32
    %10 = arith.extui %9 : i1 to i32
    %c0_i32_9 = arith.constant 0 : i32
    %11 = arith.cmpi ne, %10, %c0_i32_9 : i32
    scf.if %11 {
      %c0_10 = arith.constant 0 : index
      %c0_11 = arith.constant 0 : index
      %12 = vector.load %arg7[%c0_10, %c0_11] : memref<16x128xf32, #tpu.memory_space<vmem>>, vector<16x128xf32>
      %c0_12 = arith.constant 0 : index
      %c0_13 = arith.constant 0 : index
      %13 = vector.load %arg4[%c0_12, %c0_13] : memref<16x128xf32, #tpu.memory_space<vmem>>, vector<16x128xf32>
      %14 = arith.addf %12, %13 : vector<16x128xf32>
      %15 = vector.extract_strided_slice %14 {offsets = [0, 0], sizes = [16, 64], strides = [1, 1]} : vector<16x128xf32> to vector<16x64xf32>
      %16 = arith.negf %15 : vector<16x64xf32>
      %17 = math.exp %16 : vector<16x64xf32>
      %cst_14 = arith.constant 1.000000e+00 : f32
      %18 = vector.broadcast %cst_14 : f32 to vector<16x64xf32>
      %19 = arith.addf %18, %17 : vector<16x64xf32>
      %20 = arith.divf %18, %19 : vector<16x64xf32>
      %21 = vector.extract_strided_slice %20 {offsets = [0, 0], sizes = [16, 32], strides = [1, 1]} : vector<16x64xf32> to vector<16x32xf32>
      %22 = vector.extract_strided_slice %20 {offsets = [0, 32], sizes = [16, 32], strides = [1, 1]} : vector<16x64xf32> to vector<16x32xf32>
      %23 = vector.extract_strided_slice %14 {offsets = [0, 64], sizes = [16, 32], strides = [1, 1]} : vector<16x128xf32> to vector<16x32xf32>
      %24 = vector.extract_strided_slice %14 {offsets = [0, 96], sizes = [16, 32], strides = [1, 1]} : vector<16x128xf32> to vector<16x32xf32>
      %25 = arith.mulf %21, %24 : vector<16x32xf32>
      %26 = arith.addf %23, %25 : vector<16x32xf32>
      %27 = math.tanh %26 : vector<16x32xf32>
      %cst_15 = arith.constant 1.000000e+00 : f32
      %28 = vector.broadcast %cst_15 : f32 to vector<16x32xf32>
      %29 = arith.subf %28, %22 : vector<16x32xf32>
      %30 = arith.mulf %29, %27 : vector<16x32xf32>
      %c0_16 = arith.constant 0 : index
      %c0_17 = arith.constant 0 : index
      %31 = vector.load %arg5[%c0_16, %c0_17] : memref<16x32xf32, #tpu.memory_space<vmem>>, vector<16x32xf32>
      %32 = arith.mulf %22, %31 : vector<16x32xf32>
      %33 = arith.addf %30, %32 : vector<16x32xf32>
      %c0_18 = arith.constant 0 : index
      %c0_19 = arith.constant 0 : index
      %34 = vector.load %arg6[%c0_18, %c0_19] : memref<16x32xf32, #tpu.memory_space<vmem>>, vector<16x32xf32>
      tpu.vector_store %arg6[%c0_18, %c0_19], %33 {strides = array<i32>} : memref<16x32xf32, #tpu.memory_space<vmem>>, vector<16x32xf32>,
    } else {
    }
    return
  }
  func.func @transform_0(%arg0: i32, %arg1: i32) -> (i32, i32) {
    %c0_i32 = arith.constant 0 : i32
    return %arg0, %arg1 : i32, i32
  }
  func.func @transform_1(%arg0: i32, %arg1: i32) -> (i32, i32) {
    %c0_i32 = arith.constant 0 : i32
    %c0_i32_0 = arith.constant 0 : i32
    return %arg1, %c0_i32 : i32, i32
  }
  func.func @transform_2(%arg0: i32, %arg1: i32) -> (i32, i32) {
    %c0_i32 = arith.constant 0 : i32
    %c0_i32_0 = arith.constant 0 : i32
    return %arg0, %c0_i32 : i32, i32
  }
  func.func @transform_3(%arg0: i32, %arg1: i32) -> (i32, i32) {
    %c0_i32 = arith.constant 0 : i32
    %c0_i32_0 = arith.constant 0 : i32
    return %arg0, %c0_i32 : i32, i32
  }
  func.func @transform_4(%arg0: i32, %arg1: i32) -> (i32, i32) {
    %c0_i32 = arith.constant 0 : i32
    %c0_i32_0 = arith.constant 0 : i32
    return %arg0, %c0_i32 : i32, i32
  }
}

</mosaic_0001>

<llo_original>
// kernel: gcgru_forward.1
$region0: #{gcgru_forward.1}
  #allocation0 [shape = 'u32[]', space=smem, size = 0x4, offset = 0x4, fixed_abs, tag = 'smem constant byte address 0x4 - core index']
  #allocation1 [shape = 'u32[144,128]{1,0:T(1,128)}', space=vmem, size = 0x12000, scoped, tag = 'internal scratch']
  #allocation2 [shape = 'f32[16,128]{1,0:T(8,128)}', space=vmem, size = 0x2000, scoped, tag = 'scratch operand']
  %s0 = inlined_call_operand.vmem [shape: f32[16,64], index: 0, kind: input, shape index: {}]
  %s1 = inlined_call_operand.vmem [shape: f32[64,128], index: 1, kind: input, shape index: {}]
  %s2 = inlined_call_operand.vmem [shape: f32[16,128], index: 2, kind: input, shape index: {}]
  %s3 = inlined_call_operand.vmem [shape: f32[16,32], index: 3, kind: input, shape index: {}]
  %s4 = inlined_call_operand.hbm [shape: f32[16,32], index: 4, kind: output, shape index: {}]
  %s5 = sld [smem:[#allocation0]]
  $region34: #{gcgru_forward.1} parent=0
    _
  %s7 = ssub.s32 1, %s5
  %s8 = scalar_select 0, %s7, %s5
  $region1: #{gcgru_forward.1} parent=0
    #allocation3 [shape = 'u8[8192]{0}', space=vmem, size = 0x2000, scoped, tag = 'output window, operand 0, single buffered']
    #allocation4 [shape = 's32[1]{0}', space=sflag, size = 0x4, scoped, tag = 'scoped memory for gcgru_forward.1']
    %9 = vsyncpa [#allocation4], 0
    // Predicated region
    $region2: #{gcgru_forward.1} parent=1 // pred_check
      _
    $region3: #{gcgru_forward.1} parent=1 // pred_check_branch
      %11 = sbr.rel (0) target = $region5
    $region4: #{gcgru_forward.1} parent=1 // pred_region
      _
    $region5: #{gcgru_forward.1} parent=1 // pred_fallthru
      _
    // Predicated region
    $region6: #{gcgru_forward.1} parent=1 // pred_check
      _
    $region7: #{gcgru_forward.1} parent=1 // pred_check_branch
      %13 = sbr.rel (0) target = $region9
    $region8: #{gcgru_forward.1} parent=1 // pred_region
      _
    $region9: #{gcgru_forward.1} parent=1 // pred_fallthru
      _
    // Predicated region
    $region10: #{gcgru_forward.1} parent=1 // pred_check
      _
    $region11: #{gcgru_forward.1} parent=1 // pred_check_branch
      %15 = sbr.rel (0) target = $region13
    $region12: #{gcgru_forward.1} parent=1 // pred_region
      _
    $region13: #{gcgru_forward.1} parent=1 // pred_fallthru
      _
    // Predicated region
    $region14: #{gcgru_forward.1} parent=1 // pred_check
      _
    $region15: #{gcgru_forward.1} parent=1 // pred_check_branch
      %17 = sbr.rel (0) target = $region17
    $region16: #{gcgru_forward.1} parent=1 // pred_region
      _
    $region17: #{gcgru_forward.1} parent=1 // pred_fallthru
      _
    %p18 = scmp.eq.s32.totalorder 0, 0
    // Predicated region
    $region18: #{gcgru_forward.1} parent=1 // pred_check
      %p19 = pneg %p18
    $region19: #{gcgru_forward.1} parent=1 // pred_check_branch
      %21 = sbr.rel (%p19) target = $region21
    $region20: #{gcgru_forward.1} parent=1 // pred_region
      %22 = vst [vmem:[#allocation2] sm:$0xff] 0.0
      %23 = vst [vmem:[#allocation2 + $0x8] sm:$0xff] 0.0
    $region21: #{gcgru_forward.1} parent=1 // pred_fallthru
      _
    %v24 = vld [vmem:[#allocation2] sm:$0xff]
    %v25 = vld [vmem:[#allocation2 + $0x8] sm:$0xff]
    %v26 = vld [vmem:[%s0] sm:$0xff]
    %v27 = vld [vmem:[%s0 + $0x8] sm:$0xff]
    %v28 = vld [vmem:[%s1] sm:$0xff]
    %v29 = vld [vmem:[%s1 + $0x8] sm:$0xff]
    %v30 = vld [vmem:[%s1 + $0x10] sm:$0xff]
    %v31 = vld [vmem:[%s1 + $0x18] sm:$0xff]
    %v32 = vld [vmem:[%s1 + $0x20] sm:$0xff]
    %v33 = vld [vmem:[%s1 + $0x28] sm:$0xff]
    %v34 = vld [vmem:[%s1 + $0x30] sm:$0xff]
    %v35 = vld [vmem:[%s1 + $0x38] sm:$0xff]
    %vm36 = vcmask 523264
    %v38 = vsel %vm36, %v26, 0
    %v41 = vsel %vm36, %v27, 0
    %43 = vmatprep.subr.mxu0 0.0
    %44 = vmatpush1.msra.mxu0 0.0
    %45 = vmatprep.subr.mxu0 0.0
    %46 = vmatpush1.msra.mxu0 0.0
    %47 = vmatprep.subr.mxu0 0.0
    %48 = vmatpush1.msra.mxu0 0.0
    %49 = vmatprep.subr.mxu0 0.0
    %50 = vmatpush1.msra.mxu0 0.0
    %51 = vmatprep.subr.mxu0 0.0
    %52 = vmatpush1.msra.mxu0 0.0
    %53 = vmatprep.subr.mxu0 0.0
    %54 = vmatpush1.msra.mxu0 0.0
    %55 = vmatprep.subr.mxu0 0.0
    %56 = vmatpush1.msra.mxu0 0.0
    %57 = vmatprep.subr.mxu0 0.0
    %58 = vmatpush1.msra.mxu0 0.0
    %59 = vmatprep.subr.mxu0 0.0
    %60 = vmatpush1.msra.mxu0 %v35
    %61 = vmatprep.subr.mxu0 0.0
    %62 = vmatpush1.msra.mxu0 %v34
    %63 = vmatprep.subr.mxu0 0.0
    %64 = vmatpush1.msra.mxu0 %v33
    %65 = vmatprep.subr.mxu0 0.0
    %66 = vmatpush1.msra.mxu0 %v32
    %67 = vmatprep.subr.mxu0 0.0
    %68 = vmatpush1.msra.mxu0 %v31
    %69 = vmatprep.subr.mxu0 0.0
    %70 = vmatpush1.msra.mxu0 %v30
    %71 = vmatprep.subr.mxu0 0.0
    %72 = vmatpush1.msra.mxu0 %v29
    %73 = vmatprep.subr.mxu0 0.0
    %74 = vmatpush1.msra.mxu0 %v28
    %75 = vmatprep.subr.mxu0 0.0
    %76 = vmatpush2.msra.mxu0 0.0
    %77 = vmatprep.subr.mxu0 0.0
    %78 = vmatpush2.msra.mxu0 0.0
    %79 = vmatprep.subr.mxu0 0.0
    %80 = vmatpush2.msra.mxu0 0.0
    %81 = vmatprep.subr.mxu0 0.0
    %82 = vmatpush2.msra.mxu0 0.0
    %83 = vmatprep.subr.mxu0 0.0
    %84 = vmatpush2.msra.mxu0 0.0
    %85 = vmatprep.subr.mxu0 0.0
    %86 = vmatpush2.msra.mxu0 0.0
    %87 = vmatprep.subr.mxu0 0.0
    %88 = vmatpush2.msra.mxu0 0.0
    %89 = vmatprep.subr.mxu0 0.0
    %90 = vmatpush2.msra.mxu0 0.0
    %91 = vmatprep.subr.mxu0 0.0
    %92 = vmatpush2.msra.mxu0 0.0
    %93 = vmatprep.subr.mxu0 0.0
    %94 = vmatpush2.msra.mxu0 0.0
    %95 = vmatprep.subr.mxu0 0.0
    %96 = vmatpush2.msra.mxu0 0.0
    %97 = vmatprep.subr.mxu0 0.0
    %98 = vmatpush2.msra.mxu0 0.0
    %99 = vmatprep.subr.mxu0 0.0
    %100 = vmatpush2.msra.mxu0 0.0
    %101 = vmatprep.subr.mxu0 0.0
    %102 = vmatpush2.msra.mxu0 0.0
    %103 = vmatprep.subr.mxu0 0.0
    %104 = vmatpush2.msra.mxu0 0.0
    %105 = vmatprep.subr.mxu0 0.0
    %106 = vmatpush2.msra.mxu0 0.0
    %107 = vmatprep.mubr.f32.mxu0 0.0
    %108 = vmatmul.mubr.f32.gmra.mxu0 %v38
    %v109 = vpop.f32.mrf.mxu0
    %v110 = vadd.f32 0.0, %v109
    %v111 = vpop.f32.mrf.mxu0
    %112 = vmatprep.mubr.f32.mxu0 0.0
    %113 = vmatmul.mubr.f32.gmra.mxu0 %v41
    %v114 = vpop.f32.mrf.mxu0
    %v115 = vadd.f32 0.0, %v114
    %v116 = vpop.f32.mrf.mxu0
    %117 = vdwg.mxu0
    %v118 = vadd.f32 %v24, %v110
    %v119 = vadd.f32 %v25, %v115
    %120 = vst [vmem:[#allocation2] sm:$0xff] %v118
    %121 = vst [vmem:[#allocation2 + $0x8] sm:$0xff] %v119
    // Predicated region
    $region22: #{gcgru_forward.1} parent=1 // pred_check
      %p122 = pneg %p18
    $region23: #{gcgru_forward.1} parent=1 // pred_check_branch
      %124 = sbr.rel (%p122) target = $region25
    $region24: #{gcgru_forward.1} parent=1 // pred_region
      %v125 = vld [vmem:[#allocation2] sm:$0xff]
      %v126 = vld [vmem:[#allocation2 + $0x8] sm:$0xff]
      %v127 = vld [vmem:[%s2] sm:$0xff]
      %v128 = vld [vmem:[%s2 + $0x8] sm:$0xff]
      %v129 = vadd.f32 %v125, %v127
      %v130 = vadd.f32 %v126, %v128
      %v131 = vxor.u32 %v129, 2147483648
      %v132 = vxor.u32 %v130, 2147483648
      %v133 = vmul.f32 %v131, 1.442695
      %v134 = vpow.pop %v133
      %v135 = vmul.f32 %v132, 1.442695
      %v136 = vpow.pop %v135
      %v137 = vadd.f32 %v134, 1.0
      %v138 = vadd.f32 %v136, 1.0
      %v139 = vrcp.pop %v137
      %v140 = vmul.f32 1.0, %v139
      %v141 = vrcp.pop %v138
      %v142 = vmul.f32 1.0, %v141
      %145 = vrot.lane.b32.xlu0 %v129, 32
      %v146 = vpop.permute.xlu0 %145
      %147 = vrot.lane.b32.xlu0 %v130, 32
      %v148 = vpop.permute.xlu0 %147
      %v151 = vmul.f32 %v140, %v146
      %v152 = vmul.f32 %v142, %v148
      %155 = vrot.lane.b32.xlu0 %v151, 64
      %v156 = vpop.permute.xlu0 %155
      %157 = vrot.lane.b32.xlu0 %v152, 64
      %v158 = vpop.permute.xlu0 %157
      %v161 = vadd.f32 %v129, %v156
      %v162 = vadd.f32 %v130, %v158
      %v163 = vtanh.pop %v161
      %v164 = vtanh.pop %v162
      %v165 = vsub.f32 1.0, %v140
      %v166 = vsub.f32 1.0, %v142
      %169 = vrot.lane.b32.xlu0 %v163, 96
      %v170 = vpop.permute.xlu0 %169
      %171 = vrot.lane.b32.xlu0 %v164, 96
      %v172 = vpop.permute.xlu0 %171
      %v175 = vmul.f32 %v165, %v170
      %v176 = vmul.f32 %v166, %v172
      %v177 = vld [vmem:[%s3] sm:$0xff]
      %v178 = vld [vmem:[%s3 + $0x8] sm:$0xff]
      %181 = vrot.lane.b32.xlu0 %v177, 32
      %v182 = vpop.permute.xlu0 %181
      %183 = vrot.lane.b32.xlu0 %v178, 32
      %v184 = vpop.permute.xlu0 %183
      %v187 = vmul.f32 %v140, %v182
      %v188 = vmul.f32 %v142, %v184
      %v189 = vadd.f32 %v175, %v187
      %v190 = vadd.f32 %v176, %v188
      %193 = vrot.lane.b32.xlu0 %v189, 96
      %v194 = vpop.permute.xlu0 %193
      %195 = vrot.lane.b32.xlu0 %v190, 96
      %v196 = vpop.permute.xlu0 %195
      %vm199 = vcmask 261120
      %200 = vst.msk [vmem:[#allocation3] sm:$0xff] %vm199, %v194
      %201 = vst.msk [vmem:[#allocation3 + $0x8] sm:$0xff] %vm199, %v196
    $region25: #{gcgru_forward.1} parent=1 // pred_fallthru
      _
    // Predicated region
    $region26: #{gcgru_forward.1} parent=1 // pred_check
      _
    $region27: #{gcgru_forward.1} parent=1 // pred_check_branch
      %203 = sbr.rel (0) target = $region29
    $region28: #{gcgru_forward.1} parent=1 // pred_region
      %s205 = ssub.s32 256, 256
      %206 = vsyncadd [#allocation4], %s205
      %s207 = sshll.u32 [#allocation3], 4
      %s208 = int_to_ptr.vmem [resolvable:$true] %s207
      %213 = dma.vmem_to_hbm [thread:$0]  %s208, 256, %s4, [#allocation4], 128, 128, 8
    $region29: #{gcgru_forward.1} parent=1 // pred_fallthru
      _
    // Predicated region
    $region30: #{gcgru_forward.1} parent=1 // pred_check
      _
    $region31: #{gcgru_forward.1} parent=1 // pred_check_branch
      %215 = sbr.rel (0) target = $region33
    $region32: #{gcgru_forward.1} parent=1 // pred_region
      %216 = dma.done [#allocation4], 256
    $region33: #{gcgru_forward.1} parent=1 // pred_fallthru
      _
    %217 = vsyncpa [#allocation4], 1

</llo_original>
